<compile_context>
chip_gen: v5e
topology: v5e:2x2
jax: 0.10.0
libtpu: 0.0.40
codegen_flags: <defaults>
</compile_context>

<pallas_src>
import jax
import jax.numpy as jnp
from jax.experimental import pallas as pl
from jax.experimental.pallas import tpu as pltpu


def _round_up(x, m):
    return (x + m - 1) // m * m


def _cdiv(a, b):
    return -(-a // b)


def _choose_tm(Mp, K, D, B, out_itemsize, *,
               vmem_budget=24 * 1024 * 1024, tm_cap=8192):
    """Token-tile width derived from the VMEM working-set budget.

    Per token column the working set is roughly:
      2 * K * 2             double-buffered streamed input  (bf16)
      2 * D * out_itemsize  double-buffered streamed output
      D * 4                 one (D, tm) f32 matmul temp
    """
    per_tok = 2 * (K * 2 + D * out_itemsize) + D * 4
    tm = max(128, (vmem_budget // per_tok) // 128 * 128)
    tm = min(tm, tm_cap, _round_up(Mp, 128))
    # v7x megacore: ensure the (B, token-blocks) grid has >= 2 steps so both
    # TensorCores get work even when B == 1.
    if B * _cdiv(Mp, tm) < 2 and Mp > 128:
        tm = max(128, _round_up(_cdiv(Mp, 2), 128))
    return tm


def _patch_proj_kernel(w_ref, b_ref, x_ref, o_ref):
    # w_ref: (D, K) bf16 (resident), b_ref: (D, 1) f32 (resident),
    # x_ref: (1, K, tm) bf16 (streamed), o_ref: (1, D, tm) out_dtype.
    acc = jnp.dot(w_ref[...], x_ref[0],
                  preferred_element_type=jnp.float32)        # (D, tm) f32 on MXU
    o_ref[0] = (acc + b_ref[...]).astype(o_ref.dtype)        # lane-dense store


def patch_proj_transposed(patches_t, w_flat, bias2d, *, out_dtype=jnp.bfloat16):
    """patches_t: (B, K, Mp) bf16, w_flat: (D, K) bf16, bias2d: (D, 1) f32
    -> (B, D, Mp) out_dtype (f32 accumulation inside the dot)."""
    B, K, Mp = patches_t.shape
    D = w_flat.shape[0]
    out_itemsize = jnp.dtype(out_dtype).itemsize

    tm = _choose_tm(Mp, K, D, B, out_itemsize)
    n_tok_blocks = _cdiv(Mp, tm)          # ragged edge handled by Pallas masking
    grid = (B, n_tok_blocks)

    cost = pl.CostEstimate(
        flops=2 * B * D * K * Mp,
        transcendentals=0,
        bytes_accessed=(B * K * Mp * 2          # bf16 token stream
                        + D * K * 2 + D * 4     # resident weight + bias
                        + B * D * Mp * out_itemsize))

    out = pl.pallas_call(
        _patch_proj_kernel,
        out_shape=jax.ShapeDtypeStruct((B, D, Mp), out_dtype),
        grid_spec=pltpu.PrefetchScalarGridSpec(
            num_scalar_prefetch=0,
            grid=grid,
            in_specs=[
                pl.BlockSpec((D, K), lambda b, m: (0, 0)),         # weight, resident
                pl.BlockSpec((D, 1), lambda b, m: (0, 0)),         # bias, resident
                pl.BlockSpec((1, K, tm), lambda b, m: (b, 0, m)),  # tokens, streamed
            ],
            out_specs=pl.BlockSpec((1, D, tm), lambda b, m: (b, 0, m)),
        ),
        compiler_params=pltpu.CompilerParams(
            dimension_semantics=("parallel", "parallel"),  # megacore-shardable
            vmem_limit_bytes=32 * 1024 * 1024,             # explicit; safe on v7x
            allow_input_fusion=[False, False, True],       # let XLA fold im2col
        ),
        cost_estimate=cost,
    )(w_flat, bias2d, patches_t)
    return out


class PatchVideoTempMaskPallas:
    """JAX/Pallas equivalent of PatchVideoTempMask.forward (Conv3d patch embed)."""

    def __init__(self, dim_c, dim_t, dim_h, dim_w, dim_hidden,
                 patch_s=2, patch_t=1, key=None, out_dtype=jnp.bfloat16):
        self.patch_s = patch_s
        self.patch_t = patch_t
        self.dim_c = dim_c
        self.dim_t = dim_t
        self.dim_h = dim_h
        self.dim_w = dim_w
        self.dim_hidden = dim_hidden
        self.out_dtype = out_dtype
        in_c = dim_c + 1  # extra temporal-mask channel
        if key is None:
            key = jax.random.PRNGKey(0)
        kw, kb = jax.random.split(key)
        fan_in = in_c * patch_t * patch_s * patch_s
        bound = 1.0 / (fan_in ** 0.5)
        # PyTorch Conv3d layout (out_c, in_c, kt, kh, kw); deterministic init.
        self.weight = jax.random.uniform(
            kw, (dim_hidden, in_c, patch_t, patch_s, patch_s),
            minval=-bound, maxval=bound, dtype=jnp.float32)
        self.bias = jax.random.uniform(
            kb, (dim_hidden,), minval=-bound, maxval=bound, dtype=jnp.float32)
        # Hoisted, kernel-ready parameters (built once, not per forward).
        # Flattened K order = (c, dt, dh, dw), matching the patch layout below.
        self.w_flat_bf16 = self.weight.reshape(dim_hidden, fan_in).astype(jnp.bfloat16)
        self.bias2d = self.bias.reshape(dim_hidden, 1).astype(jnp.float32)

    def __call__(self, x):
        # x: (B, C, T, H, W) float32 (NCDHW, matching the PyTorch conv input)
        B, C, T, H, W = x.shape
        pt, ps, D = self.patch_t, self.patch_s, self.dim_hidden
        Tp, Hp, Wp = T // pt, H // ps, W // ps

        # Cast FIRST so the im2col transpose moves 2-byte elements (perf review).
        x = x.astype(jnp.bfloat16)
        # Match Conv3d's valid-stride flooring if extents aren't divisible.
        if (Tp * pt, Hp * ps, Wp * ps) != (T, H, W):
            x = x[:, :, :Tp * pt, :Hp * ps, :Wp * ps]

        # --- glue: im2col into (B, K, Mp), K=(c,dt,dh,dw), Mp=(t',h',w') ---
        # TODO(synk): strided patch gather has no rectangular BlockSpec
        # equivalent; it stays in XLA (allow_input_fusion may fold it into the
        # Pallas input DMA when jitted).
        xp = x.reshape(B, C, Tp, pt, Hp, ps, Wp, ps)
        xp = jnp.transpose(xp, (0, 1, 3, 5, 7, 2, 4, 6))  # (B,C,pt,ps,ps,T',H',W')
        patches_t = xp.reshape(B, C * pt * ps * ps, Tp * Hp * Wp)

        # --- hot path: Pallas matmul + bias; output already channels-first ---
        out = patch_proj_transposed(patches_t, self.w_flat_bf16, self.bias2d,
                                    out_dtype=self.out_dtype)

        # Free reshape (no transpose): (B, D, Mp) -> (B, D, T', H', W').
        return out.reshape(B, D, Tp, Hp, Wp)


def _reference_forward(x, weight, bias, pt, ps):
    """Pure-JAX reference via lax.conv_general_dilated (validates the kernel)."""
    out = jax.lax.conv_general_dilated(
        x, weight, window_strides=(pt, ps, ps), padding="VALID",
        dimension_numbers=("NCDHW", "OIDHW", "NCDHW"),
        precision=jax.lax.Precision.HIGHEST)
    return out + bias.reshape(1, -1, 1, 1, 1)


if __name__ == "__main__":
    # Small, consistent shapes: dim_c=4 -> input channels = 5 (mask channel added).
    B, dim_c, T, H, W = 2, 4, 8, 16, 16
    dim_hidden, patch_s, patch_t = 32, 2, 1

    module = PatchVideoTempMaskPallas(
        dim_c, T, H, W, dim_hidden, patch_s=patch_s, patch_t=patch_t,
        key=jax.random.PRNGKey(0))

    x = jax.random.normal(jax.random.PRNGKey(1),
                          (B, dim_c + 1, T, H, W), dtype=jnp.float32)

    fwd = jax.jit(module.__call__)
    out = jax.block_until_ready(fwd(x))
    assert out.shape == (B, dim_hidden, T // patch_t, H // patch_s, W // patch_s)
    assert out.dtype == jnp.bfloat16
    out_f32 = out.astype(jnp.float32)

    # Tight-ish check: reference with the same bf16 input rounding, f32 accum
    # (the only extra error vs. the kernel is accumulation order + the final
    # bf16 output rounding).
    ref_bf16 = jax.block_until_ready(_reference_forward(
        x.astype(jnp.bfloat16).astype(jnp.float32),
        module.weight.astype(jnp.bfloat16).astype(jnp.float32),
        module.bias, patch_t, patch_s))
    assert jnp.allclose(out_f32, ref_bf16, atol=2e-2, rtol=2e-2)

    # Sanity check vs. the full-f32 conv (loosened for bf16 operand/output rounding).
    ref_f32 = jax.block_until_ready(_reference_forward(
        x, module.weight, module.bias, patch_t, patch_s))
    assert jnp.allclose(out_f32, ref_f32, atol=6e-2, rtol=6e-2)

    print("KERNEL_OK")
</pallas_src>

<mosaic_0001>
module attributes {stable_mosaic.version = 11 : i64} {
  func.func @_patch_proj_kernel(%arg0: i32, %arg1: i32, %arg2: memref<32x20xbf16, #tpu.memory_space<vmem>>, %arg3: memref<32x1xf32, #tpu.memory_space<vmem>>, %arg4: memref<1x20x512xbf16, #tpu.memory_space<vmem>>, %arg5: memref<1x32x512xbf16, #tpu.memory_space<vmem>>) attributes {dimension_semantics = [#tpu.dimension_semantics<parallel>, #tpu.dimension_semantics<parallel>], iteration_bounds = array<i64: 2, 1>, scalar_prefetch = 0 : i64, scratch_operands = 0 : i64, tpu.core_type = #tpu.core_type<tc>, window_params = [{pipeline_mode = #tpu.pipeline_mode<synchronous>, transform_indices = @transform_0, window_bounds = array<i64: 32, 20>}, {pipeline_mode = #tpu.pipeline_mode<synchronous>, transform_indices = @transform_1, window_bounds = array<i64: 32, 1>}, {transform_indices = @transform_2, window_bounds = array<i64: 1, 20, 512>}, {transform_indices = @transform_3, window_bounds = array<i64: 1, 32, 512>}]} {
    %c0 = arith.constant 0 : index
    %c0_0 = arith.constant 0 : index
    %0 = vector.load %arg2[%c0, %c0_0] : memref<32x20xbf16, #tpu.memory_space<vmem>>, vector<32x20xbf16>
    %c0_1 = arith.constant 0 : index
    %c0_2 = arith.constant 0 : index
    %c0_3 = arith.constant 0 : index
    %1 = vector.load %arg4[%c0_1, %c0_2, %c0_3] : memref<1x20x512xbf16, #tpu.memory_space<vmem>>, vector<1x20x512xbf16>
    %2 = vector.shape_cast %1 : vector<1x20x512xbf16> to vector<20x512xbf16>
    %cst = arith.constant dense<0.000000e+00> : vector<32x512xf32>
    %3 = tpu.matmul %0, %2, %cst {dimension_numbers = #tpu.dot_dimension_numbers<[1], [0], [0], [1], [0, 0, 1, 1], [], []>} : vector<32x20xbf16>, vector<20x512xbf16>, vector<32x512xf32> -> vector<32x512xf32>
    %c0_4 = arith.constant 0 : index
    %c0_5 = arith.constant 0 : index
    %4 = vector.load %arg3[%c0_4, %c0_5] : memref<32x1xf32, #tpu.memory_space<vmem>>, vector<32x1xf32>
    %5 = vector.broadcast %4 : vector<32x1xf32> to vector<32x512xf32>
    %6 = arith.addf %3, %5 : vector<32x512xf32>
    %7 = arith.truncf %6 : vector<32x512xf32> to vector<32x512xbf16>
    %c0_6 = arith.constant 0 : index
    %c0_7 = arith.constant 0 : index
    %c0_8 = arith.constant 0 : index
    %8 = vector.load %arg5[%c0_6, %c0_7, %c0_8] : memref<1x32x512xbf16, #tpu.memory_space<vmem>>, vector<1x32x512xbf16>
    %9 = vector.shape_cast %8 : vector<1x32x512xbf16> to vector<32x512xbf16>
    %10 = vector.shape_cast %7 : vector<32x512xbf16> to vector<1x32x512xbf16>
    tpu.vector_store %arg5[%c0_6, %c0_7, %c0_8], %10 {strides = array<i32>} : memref<1x32x512xbf16, #tpu.memory_space<vmem>>, vector<1x32x512xbf16>,
    return
  }
  func.func @transform_0(%arg0: i32, %arg1: i32) -> (i32, i32) {
    %c0_i32 = arith.constant 0 : i32
    %c0_i32_0 = arith.constant 0 : i32
    %c0_i32_1 = arith.constant 0 : i32
    return %c0_i32, %c0_i32_0 : i32, i32
  }
  func.func @transform_1(%arg0: i32, %arg1: i32) -> (i32, i32) {
    %c0_i32 = arith.constant 0 : i32
    %c0_i32_0 = arith.constant 0 : i32
    %c0_i32_1 = arith.constant 0 : i32
    return %c0_i32, %c0_i32_0 : i32, i32
  }
  func.func @transform_2(%arg0: i32, %arg1: i32) -> (i32, i32, i32) {
    %c0_i32 = arith.constant 0 : i32
    %c0_i32_0 = arith.constant 0 : i32
    return %arg0, %c0_i32, %arg1 : i32, i32, i32
  }
  func.func @transform_3(%arg0: i32, %arg1: i32) -> (i32, i32, i32) {
    %c0_i32 = arith.constant 0 : i32
    %c0_i32_0 = arith.constant 0 : i32
    return %arg0, %c0_i32, %arg1 : i32, i32, i32
  }
}

</mosaic_0001>

<llo_original>
// kernel: a_call__.1
$region0: #{a_call__.1}
  #allocation0 [shape = 'u32[]', space=smem, size = 0x4, offset = 0x4, fixed_abs, tag = 'smem constant byte address 0x4 - core index']
  #allocation1 [shape = 'u32[72,128]{1,0:T(1,128)}', space=vmem, size = 0x9000, scoped, tag = 'internal scratch']
  %s0 = inlined_call_operand.vmem [shape: bf16[32,20], index: 0, kind: input, shape index: {}]
  %s1 = inlined_call_operand.vmem [shape: f32[32,1], index: 1, kind: input, shape index: {}]
  %s2 = inlined_call_operand.vmem [shape: bf16[2,20,512], index: 2, kind: input, shape index: {}]
  %s3 = inlined_call_operand.vmem [shape: bf16[2,32,512], index: 3, kind: output, shape index: {}]
  %s4 = sld [smem:[#allocation0]]
  $region45: #{a_call__.1} parent=0
    _
  %s6 = ssub.s32 1, %s4
  %s7 = scalar_select 0, %s6, %s4
  loop: start=0, step=1, limit=4
  $region2: #{a_call__.1} parent=0 // loop_pre_header
    _
  $region3: #{a_call__.1} parent=0 // loop_header
    %s9 = sphi 0, %s13
    %p10 = scmp.ge.s32.totalorder %s9, 4
    %s16 = sphi 0, %s28
    %s17 = sphi 0, %s24
    %s18 = sphi 0, %s16
    %s19 = sphi 0, %s17
    %s20 = sphi 0, %s18
    %s21 = sphi 0, %s19
    %s29 = sphi 0, %s29
    %s31 = sphi 0, %s29
    %s32 = sphi 0, %s31
    %s46 = sphi 0, %s32
    %s50 = sphi 0, %s50
    %s52 = sphi 0, %s50
    %s53 = sphi 0, %s52
    %s67 = sphi 0, %s53
    %s75 = sphi 0, %s77
    %s78 = sphi 0, %s75
    %s79 = sphi 0, %s78
    %s95 = sphi 0, %s79
    %s103 = sphi 0, %s105
    %s106 = sphi 0, %s103
    %s107 = sphi 0, %s106
    %s123 = sphi 0, %s107
  $region4: #{a_call__.1} parent=0 // loop_header_branch
    %12 = sbr.rel (%p10) target = $region8
  $region5: #{a_call__.1} parent=0 // loop_body
    %s14 = ssub.s32 %s9, 1
    %s15 = ssub.s32 %s9, 2
    %s22 = sadd.s32 1, %s17
    %p23 = scmp.ge.s32.totalorder %s22, 1
    %s24 = scalar_select %p23, 0, %s22
    %s25 = sadd.s32 1, %s16
    %s26 = scalar_select %p23, %s25, %s16
    %p27 = scmp.ge.s32.totalorder %s26, 2
    %s28 = scalar_select %p27, 0, %s26
    %s30 = sadd.s32 %s29, 1
    %p33 = scmp.eq.s32.totalorder %s9, 1
    %p34 = scmp.ne.s32.totalorder %s29, %s31
    %p35 = scmp.eq.s32.totalorder %s9, 0
    %p36 = por %p34, %p35
    %p37 = scmp.ne.s32.totalorder %s29, %s31
    %p38 = scmp.eq.s32.totalorder %s14, 1
    %p39 = por %p37, %p38
    %p40 = scmp.ne.s32.totalorder %s31, %s32
    %p41 = scmp.eq.s32.totalorder %s14, 0
    %p42 = por %p40, %p41
    %p43 = scmp.ne.s32.totalorder %s31, %s32
    %p44 = scmp.eq.s32.totalorder %s15, 1
    %p45 = por %p43, %p44
    %p47 = scmp.ne.s32.totalorder %s32, %s46
    %p48 = scmp.eq.s32.totalorder %s15, 0
    %p49 = por %p47, %p48
    %s51 = sadd.s32 %s50, 1
    %p54 = scmp.eq.s32.totalorder %s9, 1
    %p55 = scmp.ne.s32.totalorder %s50, %s52
    %p56 = scmp.eq.s32.totalorder %s9, 0
    %p57 = por %p55, %p56
    %p58 = scmp.ne.s32.totalorder %s50, %s52
    %p59 = scmp.eq.s32.totalorder %s14, 1
    %p60 = por %p58, %p59
    %p61 = scmp.ne.s32.totalorder %s52, %s53
    %p62 = scmp.eq.s32.totalorder %s14, 0
    %p63 = por %p61, %p62
    %p64 = scmp.ne.s32.totalorder %s52, %s53
    %p65 = scmp.eq.s32.totalorder %s15, 1
    %p66 = por %p64, %p65
    %p68 = scmp.ne.s32.totalorder %s53, %s67
    %p69 = scmp.eq.s32.totalorder %s15, 0
    %p70 = por %p68, %p69
    %s71 = ssub.s32 %s16, %s28
    %s72 = ssub.s32 %s17, %s24
    %s73 = sor.u32 %s71, %s72
    %p74 = scmp.eq.s32.totalorder %s73, 0
    %s76 = sadd.s32 %s75, 1
    %s77 = scalar_select %p74, %s75, %s76
    %p80 = pneg %p74
    %p81 = scmp.eq.s32.totalorder %s9, 1
    %p82 = por %p80, %p81
    %p83 = scmp.ne.s32.totalorder %s75, %s78
    %p84 = scmp.eq.s32.totalorder %s9, 0
    %p85 = por %p83, %p84
    %p86 = scmp.ne.s32.totalorder %s75, %s78
    %p87 = scmp.eq.s32.totalorder %s14, 1
    %p88 = por %p86, %p87
    %p89 = scmp.ne.s32.totalorder %s78, %s79
    %p90 = scmp.eq.s32.totalorder %s14, 0
    %p91 = por %p89, %p90
    %p92 = scmp.ne.s32.totalorder %s78, %s79
    %p93 = scmp.eq.s32.totalorder %s15, 1
    %p94 = por %p92, %p93
    %p96 = scmp.ne.s32.totalorder %s79, %s95
    %p97 = scmp.eq.s32.totalorder %s15, 0
    %p98 = por %p96, %p97
    %s99 = ssub.s32 %s16, %s28
    %s100 = ssub.s32 %s17, %s24
    %s101 = sor.u32 %s99, %s100
    %p102 = scmp.eq.s32.totalorder %s101, 0
    %s104 = sadd.s32 %s103, 1
    %s105 = scalar_select %p102, %s103, %s104
    %p108 = pneg %p102
    %p109 = scmp.eq.s32.totalorder %s9, 1
    %p110 = por %p108, %p109
    %p111 = scmp.ne.s32.totalorder %s103, %s106
    %p112 = scmp.eq.s32.totalorder %s9, 0
    %p113 = por %p111, %p112
    %p114 = scmp.ne.s32.totalorder %s103, %s106
    %p115 = scmp.eq.s32.totalorder %s14, 1
    %p116 = por %p114, %p115
    %p117 = scmp.ne.s32.totalorder %s106, %s107
    %p118 = scmp.eq.s32.totalorder %s14, 0
    %p119 = por %p117, %p118
    %p120 = scmp.ne.s32.totalorder %s106, %s107
    %p121 = scmp.eq.s32.totalorder %s15, 1
    %p122 = por %p120, %p121
    %p124 = scmp.ne.s32.totalorder %s107, %s123
    %p125 = scmp.eq.s32.totalorder %s15, 0
    %p126 = por %p124, %p125
    %p127 = scmp.le.s32.totalorder 1, %s9
    %p128 = scmp.lt.s32.totalorder %s9, 3
    %p129 = pnand %p127, %p128
    %p130 = pneg %p129
    // Predicated region
    $region9: #{a_call__.1} parent=5 // pred_check
      _
    $region10: #{a_call__.1} parent=5 // pred_check_branch
      %132 = sbr.rel (%p129) target = $region12
    $region11: #{a_call__.1} parent=5 // pred_region
      %s133 = ssub.s32 %s9, 1
      // Predicated region
      $region13: #{a_call__.1} parent=11 // pred_check
        %p134 = pneg %p42
      $region14: #{a_call__.1} parent=11 // pred_check_branch
        %136 = sbr.rel (%p134) target = $region16
      $region15: #{a_call__.1} parent=11 // pred_region
        _
      $region16: #{a_call__.1} parent=11 // pred_fallthru
        _
      // Predicated region
      $region17: #{a_call__.1} parent=11 // pred_check
        %p137 = pneg %p63
      $region18: #{a_call__.1} parent=11 // pred_check_branch
        %139 = sbr.rel (%p137) target = $region20
      $region19: #{a_call__.1} parent=11 // pred_region
        _
      $region20: #{a_call__.1} parent=11 // pred_fallthru
        _
    $region12: #{a_call__.1} parent=5 // pred_fallthru
      _
    %p140 = scmp.lt.s32.totalorder %s9, 2
    // Predicated region
    $region21: #{a_call__.1} parent=5 // pred_check
      %p141 = pneg %p140
    $region22: #{a_call__.1} parent=5 // pred_check_branch
      %143 = sbr.rel (%p141) target = $region24
    $region23: #{a_call__.1} parent=5 // pred_region
      // Predicated region
      $region25: #{a_call__.1} parent=23 // pred_check
        %p144 = pneg %p85
      $region26: #{a_call__.1} parent=23 // pred_check_branch
        %146 = sbr.rel (%p144) target = $region28
      $region27: #{a_call__.1} parent=23 // pred_region
        %s147 = smul.u32 4, %s17
        %p148 = scmp.lt.s32.totalorder %s16, 1
        %s149 = scalar_select %p148, %s16, 1
        %p150 = scmp.lt.s32.totalorder %s147, 3
        %s151 = scalar_select %p150, %s147, 3
        %s152 = smul.addr %s149, 12
        %s153 = sadd.s32 %s151, %s152
        %s154 = smul.addr %s153, 4
        %s155 = scalar_lea.vmem %s2, %s154
        %s156 = smul.u32 4, %s17
      $region28: #{a_call__.1} parent=23 // pred_fallthru
        _
    $region24: #{a_call__.1} parent=5 // pred_fallthru
      _
    %p157 = scmp.le.s32.totalorder 1, %s9
    %p158 = scmp.lt.s32.totalorder %s9, 3
    %p159 = pnand %p157, %p158
    %p160 = pneg %p159
    // Predicated region
    $region29: #{a_call__.1} parent=5 // pred_check
      _
    $region30: #{a_call__.1} parent=5 // pred_check_branch
      %162 = sbr.rel (%p159) target = $region32
    $region31: #{a_call__.1} parent=5 // pred_region
      %s163 = ssub.s32 %s9, 1
      %p164 = pneg %p42
      %p165 = pneg %p39
      %p166 = pneg %p63
      %p167 = pneg %p60
      %s168 = smul.u32 4, %s19
      %p169 = scmp.lt.s32.totalorder %s18, 1
      %s170 = scalar_select %p169, %s18, 1
      %p171 = scmp.lt.s32.totalorder %s168, 3
      %s172 = scalar_select %p171, %s168, 3
      %s173 = smul.addr %s170, 12
      %s174 = sadd.s32 %s172, %s173
      %s175 = smul.addr %s174, 4
      %s176 = scalar_lea.vmem %s2, %s175
      %p177 = pneg %p91
      %p178 = pneg %p88
      %p179 = pneg %p119
      %p180 = pneg %p116
      %s181 = smul.u32 4, %s19
      %p182 = scmp.lt.s32.totalorder %s18, 1
      %s183 = scalar_select %p182, %s18, 1
      %p184 = scmp.lt.s32.totalorder %s181, 3
      %s185 = scalar_select %p184, %s181, 3
      %s186 = smul.addr %s183, 16
      %s187 = sadd.s32 %s185, %s186
      %s188 = smul.addr %s187, 4
      %s189 = scalar_lea.vmem %s3, %s188
      %s190 = smul.u32 4, %s19
      %p191 = scmp.lt.s32.totalorder %s18, 1
      %s192 = scalar_select %p191, %s18, 1
      %p193 = scmp.lt.s32.totalorder %s190, 3
      %s194 = scalar_select %p193, %s190, 3
      %s195 = smul.addr %s192, 12
      %s196 = sadd.s32 %s194, %s195
      %s197 = smul.addr %s196, 4
      %s198 = scalar_lea.vmem %s2, %s197
      %s199 = smul.u32 4, %s19
      %s200 = smul.u32 4, %s19
      %p201 = scmp.lt.s32.totalorder %s18, 1
      %s202 = scalar_select %p201, %s18, 1
      %p203 = scmp.lt.s32.totalorder %s200, 3
      %s204 = scalar_select %p203, %s200, 3
      %s205 = smul.addr %s202, 16
      %s206 = sadd.s32 %s204, %s205
      %s207 = smul.addr %s206, 4
      %s208 = scalar_lea.vmem %s3, %s207
      %s209 = smul.u32 4, %s19
      %v211 = vld [vmem:[%s0] sm:$0xf]
      %v212 = vld [vmem:[%s0 + $0x4] sm:$0xf]
      %v213 = vld [vmem:[%s0 + $0x8] sm:$0xf]
      %v214 = vld [vmem:[%s0 + $0xc] sm:$0xf]
      %v215 = vld [vmem:[%s198] sm:$0xff]
      %v216 = vld [vmem:[%s198 + $0x8] sm:$0xff]
      %v217 = vld [vmem:[%s198 + $0x10] sm:$0xff]
      %v218 = vld [vmem:[%s198 + $0x18] sm:$0xff]
      %v219 = vld [vmem:[%s198 + $0x20] sm:$0x33]
      %v220 = vld [vmem:[%s198 + $0x28] sm:$0x33]
      %v221 = vld [vmem:[%s1] sm:$0xff]
      %v222 = vld [vmem:[%s1 + $0x8] sm:$0xff]
      %v223 = vld [vmem:[%s1 + $0x10] sm:$0xff]
      %v224 = vld [vmem:[%s1 + $0x18] sm:$0xff]
      %226 = vset.pattern.permute.xlu0 0
      %227 = vperm.xlu0 %226, %v221
      %v228 = vpop.permute.xlu0 %227
      %231 = vset.pattern.permute.xlu0 0
      %232 = vperm.xlu0 %231, %v222
      %v233 = vpop.permute.xlu0 %232
      %236 = vset.pattern.permute.xlu0 0
      %237 = vperm.xlu0 %236, %v223
      %v238 = vpop.permute.xlu0 %237
      %241 = vset.pattern.permute.xlu0 0
      %242 = vperm.xlu0 %241, %v224
      %v243 = vpop.permute.xlu0 %242
      %v249 = vunpack.c.l.b16 %v211
      %v250 = vunpack.c.l.b16 %v212
      %v251 = vunpack.c.l.b16 %v213
      %v252 = vunpack.c.l.b16 %v214
      %v253 = vpack.c.b16 %v250, %v249
      %v254 = vpack.c.b16 %v252, %v251
      %v261 = vunpack.c.l.b16 %v215
      %v262 = vunpack.c.h.b16 %v215
      %v263 = vunpack.c.l.b16 %v216
      %v264 = vunpack.c.h.b16 %v216
      %v265 = vunpack.c.l.b16 %v217
      %v266 = vunpack.c.h.b16 %v217
      %v267 = vunpack.c.l.b16 %v218
      %v268 = vunpack.c.h.b16 %v218
      %v269 = vunpack.c.l.b16 %v219
      %v270 = vunpack.c.h.b16 %v219
      %v271 = vunpack.c.l.b16 %v220
      %v272 = vunpack.c.h.b16 %v220
      %v273 = vpack.c.b16 %v265, %v261
      %v274 = vpack.c.b16 %v266, %v262
      %v275 = vpack.c.b16 %v267, %v263
      %v276 = vpack.c.b16 %v268, %v264
      %v277 = vpack.c.b16 %v269, %v269
      %v278 = vpack.c.b16 %v270, %v270
      %v279 = vpack.c.b16 %v271, %v271
      %v280 = vpack.c.b16 %v272, %v272
      %vm285 = vcmask 162816
      %v287 = vsel %vm285, %v253, 0
      %v290 = vsel %vm285, %v254, 0
      %vm292 = vcmask 1041408
      %v294 = vsel %vm292, %v277, 0
      %v297 = vsel %vm292, %v278, 0
      %v300 = vsel %vm292, %v279, 0
      %v303 = vsel %vm292, %v280, 0
      %305 = vmatpush.bf16.msra.mxu0 0
      %306 = vmatpush.bf16.msra.mxu0 0
      %307 = vmatpush.bf16.msra.mxu0 0
      %308 = vmatpush.bf16.msra.mxu0 0
      %309 = vmatpush.bf16.msra.mxu0 0
      %310 = vmatpush.bf16.msra.mxu0 0
      %311 = vmatpush.bf16.msra.mxu0 %v294
      %312 = vmatpush.bf16.msra.mxu0 %v273
      %313 = vmatmul.bf16.gmra.mxu0 %v287
      %v314 = vpop.f32.mrf.mxu0
      %v315 = vadd.f32 %v228, %v314
      %v316 = vpop.f32.mrf.mxu0
      %v317 = vadd.f32 %v233, %v316
      %318 = vmatmul.bf16.gmra.mxu0 %v290
      %v319 = vpop.f32.mrf.mxu0
      %v320 = vadd.f32 %v238, %v319
      %v321 = vpop.f32.mrf.mxu0
      %v322 = vadd.f32 %v243, %v321
      %323 = vdwg.mxu0
      %324 = vmatpush.bf16.msra.mxu0 0
      %325 = vmatpush.bf16.msra.mxu0 0
      %326 = vmatpush.bf16.msra.mxu0 0
      %327 = vmatpush.bf16.msra.mxu0 0
      %328 = vmatpush.bf16.msra.mxu0 0
      %329 = vmatpush.bf16.msra.mxu0 0
      %330 = vmatpush.bf16.msra.mxu0 %v297
      %331 = vmatpush.bf16.msra.mxu0 %v274
      %332 = vmatmul.bf16.gmra.mxu0 %v287
      %v333 = vpop.f32.mrf.mxu0
      %v334 = vadd.f32 %v228, %v333
      %v335 = vpop.f32.mrf.mxu0
      %v336 = vadd.f32 %v233, %v335
      %337 = vmatmul.bf16.gmra.mxu0 %v290
      %v338 = vpop.f32.mrf.mxu0
      %v339 = vadd.f32 %v238, %v338
      %v340 = vpop.f32.mrf.mxu0
      %v341 = vadd.f32 %v243, %v340
      %342 = vdwg.mxu0
      %343 = vmatpush.bf16.msra.mxu0 0
      %344 = vmatpush.bf16.msra.mxu0 0
      %345 = vmatpush.bf16.msra.mxu0 0
      %346 = vmatpush.bf16.msra.mxu0 0
      %347 = vmatpush.bf16.msra.mxu0 0
      %348 = vmatpush.bf16.msra.mxu0 0
      %349 = vmatpush.bf16.msra.mxu0 %v300
      %350 = vmatpush.bf16.msra.mxu0 %v275
      %351 = vmatmul.bf16.gmra.mxu0 %v287
      %v352 = vpop.f32.mrf.mxu0
      %v353 = vadd.f32 %v228, %v352
      %v354 = vpop.f32.mrf.mxu0
      %v355 = vadd.f32 %v233, %v354
      %356 = vmatmul.bf16.gmra.mxu0 %v290
      %v357 = vpop.f32.mrf.mxu0
      %v358 = vadd.f32 %v238, %v357
      %v359 = vpop.f32.mrf.mxu0
      %v360 = vadd.f32 %v243, %v359
      %361 = vdwg.mxu0
      %362 = vmatpush.bf16.msra.mxu0 0
      %363 = vmatpush.bf16.msra.mxu0 0
      %364 = vmatpush.bf16.msra.mxu0 0
      %365 = vmatpush.bf16.msra.mxu0 0
      %366 = vmatpush.bf16.msra.mxu0 0
      %367 = vmatpush.bf16.msra.mxu0 0
      %368 = vmatpush.bf16.msra.mxu0 %v303
      %369 = vmatpush.bf16.msra.mxu0 %v276
      %370 = vmatmul.bf16.gmra.mxu0 %v287
      %v371 = vpop.f32.mrf.mxu0
      %v372 = vadd.f32 %v228, %v371
      %v373 = vpop.f32.mrf.mxu0
      %v374 = vadd.f32 %v233, %v373
      %375 = vmatmul.bf16.gmra.mxu0 %v290
      %v376 = vpop.f32.mrf.mxu0
      %v377 = vadd.f32 %v238, %v376
      %v378 = vpop.f32.mrf.mxu0
      %v379 = vadd.f32 %v243, %v378
      %380 = vdwg.mxu0
      %v381 = vpack.c.bf16 %v334, %v315
      %v382 = vpack.c.bf16 %v372, %v353
      %v383 = vpack.c.bf16 %v336, %v317
      %v384 = vpack.c.bf16 %v374, %v355
      %v385 = vpack.c.bf16 %v339, %v320
      %v386 = vpack.c.bf16 %v377, %v358
      %v387 = vpack.c.bf16 %v341, %v322
      %v388 = vpack.c.bf16 %v379, %v360
      %389 = vst [vmem:[%s208] sm:$0xff] %v381
      %390 = vst [vmem:[%s208 + $0x8] sm:$0xff] %v382
      %391 = vst [vmem:[%s208 + $0x10] sm:$0xff] %v383
      %392 = vst [vmem:[%s208 + $0x18] sm:$0xff] %v384
      %393 = vst [vmem:[%s208 + $0x20] sm:$0xff] %v385
      %394 = vst [vmem:[%s208 + $0x28] sm:$0xff] %v386
      %395 = vst [vmem:[%s208 + $0x30] sm:$0xff] %v387
      %396 = vst [vmem:[%s208 + $0x38] sm:$0xff] %v388
      %s397 = smul.u32 4, %s19
      %p398 = scmp.lt.s32.totalorder %s18, 1
      %s399 = scalar_select %p398, %s18, 1
      %p400 = scmp.lt.s32.totalorder %s397, 3
      %s401 = scalar_select %p400, %s397, 3
      %s402 = smul.addr %s399, 16
      %s403 = sadd.s32 %s401, %s402
      %s404 = smul.addr %s403, 4
      %s405 = scalar_lea.vmem %s3, %s404
      // Predicated region
      $region33: #{a_call__.1} parent=31 // pred_check
        %p406 = pneg %p116
      $region34: #{a_call__.1} parent=31 // pred_check_branch
        %408 = sbr.rel (%p406) target = $region36
      $region35: #{a_call__.1} parent=31 // pred_region
        %s409 = smul.u32 4, %s19
      $region36: #{a_call__.1} parent=31 // pred_fallthru
        _
    $region32: #{a_call__.1} parent=5 // pred_fallthru
      _
    %p410 = scmp.le.s32.totalorder 2, %s9
    // Predicated region
    $region37: #{a_call__.1} parent=5 // pred_check
      %p411 = pneg %p410
    $region38: #{a_call__.1} parent=5 // pred_check_branch
      %413 = sbr.rel (%p411) target = $region40
    $region39: #{a_call__.1} parent=5 // pred_region
      %s414 = ssub.s32 %s9, 2
      // Predicated region
      $region41: #{a_call__.1} parent=39 // pred_check
        %p415 = pneg %p122
      $region42: #{a_call__.1} parent=39 // pred_check_branch
        %417 = sbr.rel (%p415) target = $region44
      $region43: #{a_call__.1} parent=39 // pred_region
        %s418 = smul.u32 4, %s21
        %p419 = scmp.lt.s32.totalorder %s20, 1
        %s420 = scalar_select %p419, %s20, 1
        %p421 = scmp.lt.s32.totalorder %s418, 3
        %s422 = scalar_select %p421, %s418, 3
        %s423 = smul.addr %s420, 16
        %s424 = sadd.s32 %s422, %s423
        %s425 = smul.addr %s424, 4
        %s426 = scalar_lea.vmem %s3, %s425
      $region44: #{a_call__.1} parent=39 // pred_fallthru
        _
    $region40: #{a_call__.1} parent=5 // pred_fallthru
      _
  $region6: #{a_call__.1} parent=0 // loop_footer
    %s13 = sadd.s32 1, %s9
  $region7: #{a_call__.1} parent=0 // loop_footer_branch
    %8 = sbr.rel target = $region3
  $region8: #{a_call__.1} parent=0 // loop_exit
    _

</llo_original>
